<compile_context>
chip_gen: v5e
topology: v5e:2x2
jax: 0.10.0
libtpu: 0.0.40
codegen_flags: <defaults>
</compile_context>

<pallas_src>
import numpy as np
import jax
import jax.numpy as jnp
from jax.experimental import pallas as pl
from jax.experimental.pallas import tpu as pltpu

COST_CLASS = 1.0
COST_BBOX = 5.0
COST_GIOU = 2.0
EPS = 1e-6


def _round_up(x, m):
    return ((x + m - 1) // m) * m


# --------------------------------------------------------------------------- #
# Pallas kernel: one [TILE_N, M_pad] tile of the matching cost matrix.
# --------------------------------------------------------------------------- #
def _cost_kernel(logits_ref, cmat_t_ref, pbox_ref, tboxt_ref, o_ref):
    # ---- classification cost: -softmax(logits) @ class_mat.T --------------
    logits = logits_ref[...].astype(jnp.float32)                  # [T, C]
    m = jnp.max(logits, axis=-1, keepdims=True)
    e = jnp.exp(logits - m)
    inv_den = pl.reciprocal(jnp.sum(e, axis=-1, keepdims=True), approx=True)
    prob = e * inv_den                                            # [T, C]
    # bf16 MXU inputs, f32 accumulation.
    cost_class = jnp.dot(prob.astype(jnp.bfloat16),
                         cmat_t_ref[...].astype(jnp.bfloat16),
                         preferred_element_type=jnp.float32)      # [T, M]

    # Single running accumulator (keeps vreg pressure low).
    acc = (-COST_CLASS) * cost_class

    pbox = pbox_ref[...].astype(jnp.float32)                      # [T, 6]
    tboxt = tboxt_ref[...].astype(jnp.float32)                    # [6, M]

    def pcol(k):  # [T, 1]
        return pbox[:, k:k + 1]

    def trow(k):  # [1, M]
        return tboxt[k:k + 1, :]

    # ---- L1 cdist over the 6 cxcyczwhd coordinates (accumulated) ----------
    for k in range(6):
        acc = acc + COST_BBOX * jnp.abs(pcol(k) - trow(k))

    # ---- cxcyczwhd -> xyzxyz + pairwise generalized 3-D IoU ----------------
    inter = None
    enc = None
    vol_p = None
    vol_t = None
    for k in range(3):
        pw = jnp.maximum(pcol(3 + k), EPS)                        # [T, 1]
        tw = jnp.maximum(trow(3 + k), EPS)                        # [1, M]
        p_lo = pcol(k) - 0.5 * pw
        p_hi = pcol(k) + 0.5 * pw
        t_lo = trow(k) - 0.5 * tw
        t_hi = trow(k) + 0.5 * tw
        i_k = jnp.maximum(jnp.minimum(p_hi, t_hi) -
                          jnp.maximum(p_lo, t_lo), 0.0)           # [T, M]
        e_k = jnp.maximum(jnp.maximum(p_hi, t_hi) -
                          jnp.minimum(p_lo, t_lo), 0.0)           # [T, M]
        inter = i_k if inter is None else inter * i_k
        enc = e_k if enc is None else enc * e_k
        vol_p = pw if vol_p is None else vol_p * pw               # [T, 1]
        vol_t = tw if vol_t is None else vol_t * tw               # [1, M]

    union = vol_p + vol_t - inter                                 # [T, M]
    # EUP approx reciprocals; tiny epsilon guards against ~EPS^3 denominators.
    inv_union = pl.reciprocal(union + 1e-12, approx=True)
    inv_enc = pl.reciprocal(enc + 1e-12, approx=True)
    # giou = iou - (enc - union)/enc  ==  inter/union - 1 + union/enc
    giou = inter * inv_union - 1.0 + union * inv_enc
    acc = acc + COST_GIOU * (-giou)

    o_ref[...] = acc.astype(o_ref.dtype)


# --------------------------------------------------------------------------- #
# Wrapper: pad to TPU-friendly shapes, tile over the row axis.
# --------------------------------------------------------------------------- #
def _pallas_cost_matrix(logits, cmat_t, pbox, tbox_t, tile_n=128):
    """logits [N,C], cmat_t [C,M], pbox [N,6], tbox_t [6,M] -> cost [N,M] f32."""
    N, C = logits.shape
    M = tbox_t.shape[1]

    # Lane-dense columns: pad M up to a multiple of 128.
    M_pad = _round_up(max(M, 1), 128)
    # Row tile: multiple of 8, capped at tile_n (128 keeps double-buffered
    # working set comfortably inside v5e's 16 MiB / v7x's 32 MiB scoped VMEM).
    TILE_N = min(tile_n, _round_up(N, 8))
    N_pad = _round_up(N, TILE_N)

    f32 = jnp.float32
    logits = logits.astype(f32)
    cmat_t = cmat_t.astype(f32)
    pbox = pbox.astype(f32)
    tbox_t = tbox_t.astype(f32)

    if N_pad != N:
        logits = jnp.pad(logits, ((0, N_pad - N), (0, 0)))
        dummy_p = jnp.tile(jnp.array([[0.5, 0.5, 0.5, 1.0, 1.0, 1.0]], f32),
                           (N_pad - N, 1))
        pbox = jnp.concatenate([pbox, dummy_p], axis=0)
    if M_pad != M:
        cmat_t = jnp.pad(cmat_t, ((0, 0), (0, M_pad - M)))
        dummy_t = jnp.tile(jnp.array([[0.5], [0.5], [0.5], [1.0], [1.0], [1.0]], f32),
                           (1, M_pad - M))
        tbox_t = jnp.concatenate([tbox_t, dummy_t], axis=1)

    grid = (N_pad // TILE_N,)
    cost = pl.pallas_call(
        _cost_kernel,
        out_shape=jax.ShapeDtypeStruct((N_pad, M_pad), jnp.float32),
        grid_spec=pltpu.PrefetchScalarGridSpec(
            num_scalar_prefetch=0,
            grid=grid,
            in_specs=[
                pl.BlockSpec((TILE_N, C), lambda i: (i, 0)),   # per-tile rows
                pl.BlockSpec((C, M_pad), lambda i: (0, 0)),    # resident
                pl.BlockSpec((TILE_N, 6), lambda i: (i, 0)),   # per-tile rows
                pl.BlockSpec((6, M_pad), lambda i: (0, 0)),    # resident
            ],
            out_specs=pl.BlockSpec((TILE_N, M_pad), lambda i: (i, 0)),
        ),
        compiler_params=pltpu.CompilerParams(
            dimension_semantics=("parallel",),   # rows independent -> megacore
        ),
    )(logits, cmat_t, pbox, tbox_t)

    return cost[:N, :M]


# --------------------------------------------------------------------------- #
# Host-side rectangular Hungarian assignment (Jonker-Volgenant, O(n^2 m)).
# TODO(synk): sequential combinatorial algorithm, no Pallas equivalent; use
#             scipy.optimize.linear_sum_assignment in production if available.
# --------------------------------------------------------------------------- #
def _linear_sum_assignment(cost):
    cost = np.asarray(cost, dtype=np.float64)
    if cost.size == 0 or min(cost.shape) == 0:
        return (np.array([], dtype=np.int64), np.array([], dtype=np.int64))
    transpose = cost.shape[0] > cost.shape[1]
    if transpose:
        cost = cost.T
    n, m = cost.shape  # n <= m
    INF = np.inf
    u = np.zeros(n + 1)
    v = np.zeros(m + 1)
    p = np.zeros(m + 1, dtype=np.int64)   # p[j] = row matched to column j (1-based)
    way = np.zeros(m + 1, dtype=np.int64)
    for i in range(1, n + 1):
        p[0] = i
        j0 = 0
        minv = np.full(m + 1, INF)
        used = np.zeros(m + 1, dtype=bool)
        while True:
            used[j0] = True
            i0 = p[j0]
            delta = INF
            j1 = -1
            for j in range(1, m + 1):
                if not used[j]:
                    cur = cost[i0 - 1, j - 1] - u[i0] - v[j]
                    if cur < minv[j]:
                        minv[j] = cur
                        way[j] = j0
                    if minv[j] < delta:
                        delta = minv[j]
                        j1 = j
            for j in range(m + 1):
                if used[j]:
                    u[p[j]] += delta
                    v[j] -= delta
                else:
                    minv[j] -= delta
            j0 = j1
            if p[j0] == 0:
                break
        while True:
            j1 = way[j0]
            p[j0] = p[j1]
            j0 = j1
            if j0 == 0:
                break
    rows, cols = [], []
    for j in range(1, m + 1):
        if p[j] != 0:
            rows.append(p[j] - 1)
            cols.append(j - 1)
    rows = np.array(rows, dtype=np.int64)
    cols = np.array(cols, dtype=np.int64)
    if transpose:
        rows, cols = cols, rows
    order = np.argsort(rows, kind="stable")
    return rows[order], cols[order]


# --------------------------------------------------------------------------- #
# Forward: HungarianMatcher.forward equivalent.
# --------------------------------------------------------------------------- #
def hungarian_matcher(outputs, targets, soft_token=False):
    pred_logits = outputs['pred_logits']                 # [bs, nq, C]
    pred_boxes = outputs['pred_boxes']                   # [bs, nq, 6]
    bs, nq, num_classes = pred_logits.shape

    logits = pred_logits.reshape(bs * nq, num_classes)
    pbox = pred_boxes.reshape(bs * nq, 6)
    tgt_bbox = jnp.concatenate([t['boxes'] for t in targets], axis=0)

    if soft_token:
        pm = jnp.concatenate([t['positive_map'] for t in targets], axis=0)
        if pm.shape[-1] != num_classes:
            pm = pm[..., :num_classes]
        cmat = pm.astype(jnp.float32)
    else:
        tgt_ids = jnp.concatenate([t['labels'] for t in targets], axis=0)
        # gather out_prob[:, tgt_ids] expressed as matmul with one-hot selector
        # TODO(synk): could use PrefetchScalarGridSpec gather instead of one-hot
        #             matmul if C*M becomes large; MXU is idle here so the
        #             matmul is not the bottleneck at these sizes.
        cmat = jax.nn.one_hot(tgt_ids, num_classes, dtype=jnp.float32)

    C = _pallas_cost_matrix(logits, cmat.T, pbox, tgt_bbox.T)
    C = np.asarray(jax.block_until_ready(C)).reshape(bs, nq, -1)

    sizes = [int(t['boxes'].shape[0]) for t in targets]
    indices, off = [], 0
    for i, sz in enumerate(sizes):
        rows, cols = _linear_sum_assignment(C[i, :, off:off + sz])
        indices.append((rows, cols))
        off += sz
    return indices, C


# ----------------------------- reference (numpy) ----------------------------- #
def _ref_cost(logits, cmat, pbox, tbox):
    logits, cmat, pbox, tbox = [np.asarray(x, np.float64)
                                for x in (logits, cmat, pbox, tbox)]
    e = np.exp(logits - logits.max(-1, keepdims=True))
    prob = e / e.sum(-1, keepdims=True)
    cost_class = -prob @ cmat.T
    cost_bbox = np.abs(pbox[:, None, :] - tbox[None, :, :]).sum(-1)

    def to_xyz(b):
        whd = np.maximum(b[:, 3:], 1e-6)
        return np.concatenate([b[:, :3] - 0.5 * whd, b[:, :3] + 0.5 * whd], -1)

    a, b = to_xyz(pbox), to_xyz(tbox)
    lo = np.maximum(a[:, None, :3], b[None, :, :3])
    hi = np.minimum(a[:, None, 3:], b[None, :, 3:])
    inter = np.clip(hi - lo, 0, None).prod(-1)
    va = (a[:, 3:] - a[:, :3]).prod(-1)
    vb = (b[:, 3:] - b[:, :3]).prod(-1)
    union = va[:, None] + vb[None, :] - inter
    iou = inter / union
    lo2 = np.minimum(a[:, None, :3], b[None, :, :3])
    hi2 = np.maximum(a[:, None, 3:], b[None, :, 3:])
    enc = np.clip(hi2 - lo2, 0, None).prod(-1)
    giou = iou - (enc - union) / enc
    return COST_BBOX * cost_bbox + COST_CLASS * cost_class + COST_GIOU * (-giou)


if __name__ == "__main__":
    key = jax.random.PRNGKey(0)
    bs, nq, num_classes = 2, 8, 32
    k1, k2, k3, k4 = jax.random.split(key, 4)

    pred_logits = jax.random.normal(k1, (bs, nq, num_classes), jnp.float32)
    centers = jax.random.uniform(k2, (bs, nq, 3), minval=0.2, maxval=0.8)
    sizes_p = jax.random.uniform(k3, (bs, nq, 3), minval=0.05, maxval=0.3)
    pred_boxes = jnp.concatenate([centers, sizes_p], axis=-1)

    tgt_counts = [3, 4]
    targets = []
    tk = k4
    for i, n in enumerate(tgt_counts):
        tk, ka, kb, kc = jax.random.split(tk, 4)
        c = jax.random.uniform(ka, (n, 3), minval=0.2, maxval=0.8)
        s = jax.random.uniform(kb, (n, 3), minval=0.05, maxval=0.3)
        labels = jax.random.randint(kc, (n,), 0, num_classes)
        targets.append({
            "labels": labels,
            "boxes": jnp.concatenate([c, s], axis=-1),
            "positive_map": jax.nn.one_hot(labels, 256, dtype=jnp.float32),
        })

    outputs = {"pred_logits": pred_logits, "pred_boxes": pred_boxes}
    indices, C = hungarian_matcher(outputs, targets, soft_token=False)

    # ---- correctness of the Pallas-computed cost matrix vs numpy reference
    # (tolerance loosened a bit: bf16 MXU inputs + EUP approx reciprocals)
    logits_np = np.asarray(pred_logits).reshape(bs * nq, num_classes)
    pbox_np = np.asarray(pred_boxes).reshape(bs * nq, 6)
    tbox_np = np.concatenate([np.asarray(t["boxes"]) for t in targets], 0)
    ids_np = np.concatenate([np.asarray(t["labels"]) for t in targets], 0)
    cmat_np = np.eye(num_classes)[ids_np]
    C_ref = _ref_cost(logits_np, cmat_np, pbox_np, tbox_np).reshape(bs, nq, -1)
    np.testing.assert_allclose(C, C_ref, rtol=2e-2, atol=2e-2)

    # ---- matching quality: assignment from Pallas cost must achieve the
    # optimal total cost on the exact reference cost matrix (within tolerance)
    off = 0
    for i, sz in enumerate(tgt_counts):
        sub_ref = C_ref[i, :, off:off + sz]
        r_ref, c_ref = _linear_sum_assignment(sub_ref)
        opt_cost = float(sub_ref[r_ref, c_ref].sum())
        r_p, c_p = indices[i]
        got_cost = float(sub_ref[r_p, c_p].sum())
        assert abs(got_cost - opt_cost) <= 1e-3 * max(1.0, abs(opt_cost)), \
            f"batch {i}: assignment cost {got_cost} vs optimal {opt_cost}"
        assert len(r_p) == len(c_p) == min(nq, sz)
        assert r_p.dtype == np.int64 and c_p.dtype == np.int64
        off += sz

    # ---- also exercise the soft_token (dense positive_map) path
    indices_st, C_st = hungarian_matcher(outputs, targets, soft_token=True)
    np.testing.assert_allclose(C_st, C_ref, rtol=2e-2, atol=2e-2)

    print("KERNEL_OK")
</pallas_src>

<mosaic_0001>
module attributes {stable_mosaic.version = 11 : i64} {
  func.func @_cost_kernel(%arg0: i32, %arg1: memref<16x32xf32, #tpu.memory_space<vmem>>, %arg2: memref<32x128xf32, #tpu.memory_space<vmem>>, %arg3: memref<16x6xf32, #tpu.memory_space<vmem>>, %arg4: memref<6x128xf32, #tpu.memory_space<vmem>>, %arg5: memref<16x128xf32, #tpu.memory_space<vmem>>) attributes {dimension_semantics = [#tpu.dimension_semantics<parallel>], iteration_bounds = array<i64: 1>, scalar_prefetch = 0 : i64, scratch_operands = 0 : i64, tpu.core_type = #tpu.core_type<tc>, window_params = [{transform_indices = @transform_0, window_bounds = array<i64: 16, 32>}, {pipeline_mode = #tpu.pipeline_mode<synchronous>, transform_indices = @transform_1, window_bounds = array<i64: 32, 128>}, {transform_indices = @transform_2, window_bounds = array<i64: 16, 6>}, {pipeline_mode = #tpu.pipeline_mode<synchronous>, transform_indices = @transform_3, window_bounds = array<i64: 6, 128>}, {transform_indices = @transform_4, window_bounds = array<i64: 16, 128>}]} {
    %c0 = arith.constant 0 : index
    %c0_0 = arith.constant 0 : index
    %0 = vector.load %arg1[%c0, %c0_0] : memref<16x32xf32, #tpu.memory_space<vmem>>, vector<16x32xf32>
    %cst = arith.constant dense<0xFF800000> : vector<16xf32>
    %1 = vector.multi_reduction <maximumf>, %0, %cst [1] : vector<16x32xf32> to vector<16xf32>
    %2 = vector.shape_cast %1 : vector<16xf32> to vector<16x1xf32>
    %3 = vector.broadcast %2 : vector<16x1xf32> to vector<16x32xf32>
    %4 = arith.subf %0, %3 : vector<16x32xf32>
    %5 = math.exp %4 : vector<16x32xf32>
    %cst_1 = arith.constant dense<0.000000e+00> : vector<16xf32>
    %6 = vector.multi_reduction <add>, %5, %cst_1 [1] : vector<16x32xf32> to vector<16xf32>
    %7 = vector.shape_cast %6 : vector<16xf32> to vector<16x1xf32>
    %8 = tpu.reciprocal %7 {approx = true} : vector<16x1xf32> -> vector<16x1xf32>
    %9 = vector.broadcast %8 : vector<16x1xf32> to vector<16x32xf32>
    %10 = arith.mulf %5, %9 : vector<16x32xf32>
    %11 = arith.truncf %10 : vector<16x32xf32> to vector<16x32xbf16>
    %c0_2 = arith.constant 0 : index
    %c0_3 = arith.constant 0 : index
    %12 = vector.load %arg2[%c0_2, %c0_3] : memref<32x128xf32, #tpu.memory_space<vmem>>, vector<32x128xf32>
    %13 = arith.truncf %12 : vector<32x128xf32> to vector<32x128xbf16>
    %cst_4 = arith.constant dense<0.000000e+00> : vector<16x128xf32>
    %14 = tpu.matmul %11, %13, %cst_4 {dimension_numbers = #tpu.dot_dimension_numbers<[1], [0], [0], [1], [0, 0, 1, 1], [], []>} : vector<16x32xbf16>, vector<32x128xbf16>, vector<16x128xf32> -> vector<16x128xf32>
    %cst_5 = arith.constant -1.000000e+00 : f32
    %15 = vector.broadcast %cst_5 : f32 to vector<16x128xf32>
    %16 = arith.mulf %15, %14 : vector<16x128xf32>
    %c0_6 = arith.constant 0 : index
    %c0_7 = arith.constant 0 : index
    %17 = vector.load %arg3[%c0_6, %c0_7] : memref<16x6xf32, #tpu.memory_space<vmem>>, vector<16x6xf32>
    %c0_8 = arith.constant 0 : index
    %c0_9 = arith.constant 0 : index
    %18 = vector.load %arg4[%c0_8, %c0_9] : memref<6x128xf32, #tpu.memory_space<vmem>>, vector<6x128xf32>
    %19 = vector.extract_strided_slice %17 {offsets = [0, 0], sizes = [16, 1], strides = [1, 1]} : vector<16x6xf32> to vector<16x1xf32>
    %20 = vector.extract_strided_slice %18 {offsets = [0, 0], sizes = [1, 128], strides = [1, 1]} : vector<6x128xf32> to vector<1x128xf32>
    %21 = vector.broadcast %19 : vector<16x1xf32> to vector<16x128xf32>
    %22 = vector.broadcast %20 : vector<1x128xf32> to vector<16x128xf32>
    %23 = arith.subf %21, %22 : vector<16x128xf32>
    %24 = math.absf %23 : vector<16x128xf32>
    %cst_10 = arith.constant 5.000000e+00 : f32
    %25 = vector.broadcast %cst_10 : f32 to vector<16x128xf32>
    %26 = arith.mulf %25, %24 : vector<16x128xf32>
    %27 = arith.addf %16, %26 : vector<16x128xf32>
    %28 = vector.extract_strided_slice %17 {offsets = [0, 1], sizes = [16, 1], strides = [1, 1]} : vector<16x6xf32> to vector<16x1xf32>
    %29 = vector.extract_strided_slice %18 {offsets = [1, 0], sizes = [1, 128], strides = [1, 1]} : vector<6x128xf32> to vector<1x128xf32>
    %30 = vector.broadcast %28 : vector<16x1xf32> to vector<16x128xf32>
    %31 = vector.broadcast %29 : vector<1x128xf32> to vector<16x128xf32>
    %32 = arith.subf %30, %31 : vector<16x128xf32>
    %33 = math.absf %32 : vector<16x128xf32>
    %cst_11 = arith.constant 5.000000e+00 : f32
    %34 = vector.broadcast %cst_11 : f32 to vector<16x128xf32>
    %35 = arith.mulf %34, %33 : vector<16x128xf32>
    %36 = arith.addf %27, %35 : vector<16x128xf32>
    %37 = vector.extract_strided_slice %17 {offsets = [0, 2], sizes = [16, 1], strides = [1, 1]} : vector<16x6xf32> to vector<16x1xf32>
    %38 = vector.extract_strided_slice %18 {offsets = [2, 0], sizes = [1, 128], strides = [1, 1]} : vector<6x128xf32> to vector<1x128xf32>
    %39 = vector.broadcast %37 : vector<16x1xf32> to vector<16x128xf32>
    %40 = vector.broadcast %38 : vector<1x128xf32> to vector<16x128xf32>
    %41 = arith.subf %39, %40 : vector<16x128xf32>
    %42 = math.absf %41 : vector<16x128xf32>
    %cst_12 = arith.constant 5.000000e+00 : f32
    %43 = vector.broadcast %cst_12 : f32 to vector<16x128xf32>
    %44 = arith.mulf %43, %42 : vector<16x128xf32>
    %45 = arith.addf %36, %44 : vector<16x128xf32>
    %46 = vector.extract_strided_slice %17 {offsets = [0, 3], sizes = [16, 1], strides = [1, 1]} : vector<16x6xf32> to vector<16x1xf32>
    %47 = vector.extract_strided_slice %18 {offsets = [3, 0], sizes = [1, 128], strides = [1, 1]} : vector<6x128xf32> to vector<1x128xf32>
    %48 = vector.broadcast %46 : vector<16x1xf32> to vector<16x128xf32>
    %49 = vector.broadcast %47 : vector<1x128xf32> to vector<16x128xf32>
    %50 = arith.subf %48, %49 : vector<16x128xf32>
    %51 = math.absf %50 : vector<16x128xf32>
    %cst_13 = arith.constant 5.000000e+00 : f32
    %52 = vector.broadcast %cst_13 : f32 to vector<16x128xf32>
    %53 = arith.mulf %52, %51 : vector<16x128xf32>
    %54 = arith.addf %45, %53 : vector<16x128xf32>
    %55 = vector.extract_strided_slice %17 {offsets = [0, 4], sizes = [16, 1], strides = [1, 1]} : vector<16x6xf32> to vector<16x1xf32>
    %56 = vector.extract_strided_slice %18 {offsets = [4, 0], sizes = [1, 128], strides = [1, 1]} : vector<6x128xf32> to vector<1x128xf32>
    %57 = vector.broadcast %55 : vector<16x1xf32> to vector<16x128xf32>
    %58 = vector.broadcast %56 : vector<1x128xf32> to vector<16x128xf32>
    %59 = arith.subf %57, %58 : vector<16x128xf32>
    %60 = math.absf %59 : vector<16x128xf32>
    %cst_14 = arith.constant 5.000000e+00 : f32
    %61 = vector.broadcast %cst_14 : f32 to vector<16x128xf32>
    %62 = arith.mulf %61, %60 : vector<16x128xf32>
    %63 = arith.addf %54, %62 : vector<16x128xf32>
    %64 = vector.extract_strided_slice %17 {offsets = [0, 5], sizes = [16, 1], strides = [1, 1]} : vector<16x6xf32> to vector<16x1xf32>
    %65 = vector.extract_strided_slice %18 {offsets = [5, 0], sizes = [1, 128], strides = [1, 1]} : vector<6x128xf32> to vector<1x128xf32>
    %66 = vector.broadcast %64 : vector<16x1xf32> to vector<16x128xf32>
    %67 = vector.broadcast %65 : vector<1x128xf32> to vector<16x128xf32>
    %68 = arith.subf %66, %67 : vector<16x128xf32>
    %69 = math.absf %68 : vector<16x128xf32>
    %cst_15 = arith.constant 5.000000e+00 : f32
    %70 = vector.broadcast %cst_15 : f32 to vector<16x128xf32>
    %71 = arith.mulf %70, %69 : vector<16x128xf32>
    %72 = arith.addf %63, %71 : vector<16x128xf32>
    %73 = vector.extract_strided_slice %17 {offsets = [0, 3], sizes = [16, 1], strides = [1, 1]} : vector<16x6xf32> to vector<16x1xf32>
    %cst_16 = arith.constant 9.99999997E-7 : f32
    %74 = vector.broadcast %cst_16 : f32 to vector<16x1xf32>
    %75 = arith.maximumf %73, %74 : vector<16x1xf32>
    %76 = vector.extract_strided_slice %18 {offsets = [3, 0], sizes = [1, 128], strides = [1, 1]} : vector<6x128xf32> to vector<1x128xf32>
    %cst_17 = arith.constant 9.99999997E-7 : f32
    %77 = vector.broadcast %cst_17 : f32 to vector<1x128xf32>
    %78 = arith.maximumf %76, %77 : vector<1x128xf32>
    %79 = vector.extract_strided_slice %17 {offsets = [0, 0], sizes = [16, 1], strides = [1, 1]} : vector<16x6xf32> to vector<16x1xf32>
    %cst_18 = arith.constant 5.000000e-01 : f32
    %80 = vector.broadcast %cst_18 : f32 to vector<16x1xf32>
    %81 = arith.mulf %80, %75 : vector<16x1xf32>
    %82 = arith.subf %79, %81 : vector<16x1xf32>
    %83 = vector.extract_strided_slice %17 {offsets = [0, 0], sizes = [16, 1], strides = [1, 1]} : vector<16x6xf32> to vector<16x1xf32>
    %cst_19 = arith.constant 5.000000e-01 : f32
    %84 = vector.broadcast %cst_19 : f32 to vector<16x1xf32>
    %85 = arith.mulf %84, %75 : vector<16x1xf32>
    %86 = arith.addf %83, %85 : vector<16x1xf32>
    %87 = vector.extract_strided_slice %18 {offsets = [0, 0], sizes = [1, 128], strides = [1, 1]} : vector<6x128xf32> to vector<1x128xf32>
    %cst_20 = arith.constant 5.000000e-01 : f32
    %88 = vector.broadcast %cst_20 : f32 to vector<1x128xf32>
    %89 = arith.mulf %88, %78 : vector<1x128xf32>
    %90 = arith.subf %87, %89 : vector<1x128xf32>
    %91 = vector.extract_strided_slice %18 {offsets = [0, 0], sizes = [1, 128], strides = [1, 1]} : vector<6x128xf32> to vector<1x128xf32>
    %cst_21 = arith.constant 5.000000e-01 : f32
    %92 = vector.broadcast %cst_21 : f32 to vector<1x128xf32>
    %93 = arith.mulf %92, %78 : vector<1x128xf32>
    %94 = arith.addf %91, %93 : vector<1x128xf32>
    %95 = vector.broadcast %86 : vector<16x1xf32> to vector<16x128xf32>
    %96 = vector.broadcast %94 : vector<1x128xf32> to vector<16x128xf32>
    %97 = arith.minimumf %95, %96 : vector<16x128xf32>
    %98 = vector.broadcast %82 : vector<16x1xf32> to vector<16x128xf32>
    %99 = vector.broadcast %90 : vector<1x128xf32> to vector<16x128xf32>
    %100 = arith.maximumf %98, %99 : vector<16x128xf32>
    %101 = arith.subf %97, %100 : vector<16x128xf32>
    %cst_22 = arith.constant 0.000000e+00 : f32
    %102 = vector.broadcast %cst_22 : f32 to vector<16x128xf32>
    %103 = arith.maximumf %101, %102 : vector<16x128xf32>
    %104 = vector.broadcast %86 : vector<16x1xf32> to vector<16x128xf32>
    %105 = vector.broadcast %94 : vector<1x128xf32> to vector<16x128xf32>
    %106 = arith.maximumf %104, %105 : vector<16x128xf32>
    %107 = vector.broadcast %82 : vector<16x1xf32> to vector<16x128xf32>
    %108 = vector.broadcast %90 : vector<1x128xf32> to vector<16x128xf32>
    %109 = arith.minimumf %107, %108 : vector<16x128xf32>
    %110 = arith.subf %106, %109 : vector<16x128xf32>
    %cst_23 = arith.constant 0.000000e+00 : f32
    %111 = vector.broadcast %cst_23 : f32 to vector<16x128xf32>
    %112 = arith.maximumf %110, %111 : vector<16x128xf32>
    %113 = vector.extract_strided_slice %17 {offsets = [0, 4], sizes = [16, 1], strides = [1, 1]} : vector<16x6xf32> to vector<16x1xf32>
    %cst_24 = arith.constant 9.99999997E-7 : f32
    %114 = vector.broadcast %cst_24 : f32 to vector<16x1xf32>
    %115 = arith.maximumf %113, %114 : vector<16x1xf32>
    %116 = vector.extract_strided_slice %18 {offsets = [4, 0], sizes = [1, 128], strides = [1, 1]} : vector<6x128xf32> to vector<1x128xf32>
    %cst_25 = arith.constant 9.99999997E-7 : f32
    %117 = vector.broadcast %cst_25 : f32 to vector<1x128xf32>
    %118 = arith.maximumf %116, %117 : vector<1x128xf32>
    %119 = vector.extract_strided_slice %17 {offsets = [0, 1], sizes = [16, 1], strides = [1, 1]} : vector<16x6xf32> to vector<16x1xf32>
    %cst_26 = arith.constant 5.000000e-01 : f32
    %120 = vector.broadcast %cst_26 : f32 to vector<16x1xf32>
    %121 = arith.mulf %120, %115 : vector<16x1xf32>
    %122 = arith.subf %119, %121 : vector<16x1xf32>
    %123 = vector.extract_strided_slice %17 {offsets = [0, 1], sizes = [16, 1], strides = [1, 1]} : vector<16x6xf32> to vector<16x1xf32>
    %cst_27 = arith.constant 5.000000e-01 : f32
    %124 = vector.broadcast %cst_27 : f32 to vector<16x1xf32>
    %125 = arith.mulf %124, %115 : vector<16x1xf32>
    %126 = arith.addf %123, %125 : vector<16x1xf32>
    %127 = vector.extract_strided_slice %18 {offsets = [1, 0], sizes = [1, 128], strides = [1, 1]} : vector<6x128xf32> to vector<1x128xf32>
    %cst_28 = arith.constant 5.000000e-01 : f32
    %128 = vector.broadcast %cst_28 : f32 to vector<1x128xf32>
    %129 = arith.mulf %128, %118 : vector<1x128xf32>
    %130 = arith.subf %127, %129 : vector<1x128xf32>
    %131 = vector.extract_strided_slice %18 {offsets = [1, 0], sizes = [1, 128], strides = [1, 1]} : vector<6x128xf32> to vector<1x128xf32>
    %cst_29 = arith.constant 5.000000e-01 : f32
    %132 = vector.broadcast %cst_29 : f32 to vector<1x128xf32>
    %133 = arith.mulf %132, %118 : vector<1x128xf32>
    %134 = arith.addf %131, %133 : vector<1x128xf32>
    %135 = vector.broadcast %126 : vector<16x1xf32> to vector<16x128xf32>
    %136 = vector.broadcast %134 : vector<1x128xf32> to vector<16x128xf32>
    %137 = arith.minimumf %135, %136 : vector<16x128xf32>
    %138 = vector.broadcast %122 : vector<16x1xf32> to vector<16x128xf32>
    %139 = vector.broadcast %130 : vector<1x128xf32> to vector<16x128xf32>
    %140 = arith.maximumf %138, %139 : vector<16x128xf32>
    %141 = arith.subf %137, %140 : vector<16x128xf32>
    %cst_30 = arith.constant 0.000000e+00 : f32
    %142 = vector.broadcast %cst_30 : f32 to vector<16x128xf32>
    %143 = arith.maximumf %141, %142 : vector<16x128xf32>
    %144 = vector.broadcast %126 : vector<16x1xf32> to vector<16x128xf32>
    %145 = vector.broadcast %134 : vector<1x128xf32> to vector<16x128xf32>
    %146 = arith.maximumf %144, %145 : vector<16x128xf32>
    %147 = vector.broadcast %122 : vector<16x1xf32> to vector<16x128xf32>
    %148 = vector.broadcast %130 : vector<1x128xf32> to vector<16x128xf32>
    %149 = arith.minimumf %147, %148 : vector<16x128xf32>
    %150 = arith.subf %146, %149 : vector<16x128xf32>
    %cst_31 = arith.constant 0.000000e+00 : f32
    %151 = vector.broadcast %cst_31 : f32 to vector<16x128xf32>
    %152 = arith.maximumf %150, %151 : vector<16x128xf32>
    %153 = arith.mulf %103, %143 : vector<16x128xf32>
    %154 = arith.mulf %112, %152 : vector<16x128xf32>
    %155 = arith.mulf %75, %115 : vector<16x1xf32>
    %156 = arith.mulf %78, %118 : vector<1x128xf32>
    %157 = vector.extract_strided_slice %17 {offsets = [0, 5], sizes = [16, 1], strides = [1, 1]} : vector<16x6xf32> to vector<16x1xf32>
    %cst_32 = arith.constant 9.99999997E-7 : f32
    %158 = vector.broadcast %cst_32 : f32 to vector<16x1xf32>
    %159 = arith.maximumf %157, %158 : vector<16x1xf32>
    %160 = vector.extract_strided_slice %18 {offsets = [5, 0], sizes = [1, 128], strides = [1, 1]} : vector<6x128xf32> to vector<1x128xf32>
    %cst_33 = arith.constant 9.99999997E-7 : f32
    %161 = vector.broadcast %cst_33 : f32 to vector<1x128xf32>
    %162 = arith.maximumf %160, %161 : vector<1x128xf32>
    %163 = vector.extract_strided_slice %17 {offsets = [0, 2], sizes = [16, 1], strides = [1, 1]} : vector<16x6xf32> to vector<16x1xf32>
    %cst_34 = arith.constant 5.000000e-01 : f32
    %164 = vector.broadcast %cst_34 : f32 to vector<16x1xf32>
    %165 = arith.mulf %164, %159 : vector<16x1xf32>
    %166 = arith.subf %163, %165 : vector<16x1xf32>
    %167 = vector.extract_strided_slice %17 {offsets = [0, 2], sizes = [16, 1], strides = [1, 1]} : vector<16x6xf32> to vector<16x1xf32>
    %cst_35 = arith.constant 5.000000e-01 : f32
    %168 = vector.broadcast %cst_35 : f32 to vector<16x1xf32>
    %169 = arith.mulf %168, %159 : vector<16x1xf32>
    %170 = arith.addf %167, %169 : vector<16x1xf32>
    %171 = vector.extract_strided_slice %18 {offsets = [2, 0], sizes = [1, 128], strides = [1, 1]} : vector<6x128xf32> to vector<1x128xf32>
    %cst_36 = arith.constant 5.000000e-01 : f32
    %172 = vector.broadcast %cst_36 : f32 to vector<1x128xf32>
    %173 = arith.mulf %172, %162 : vector<1x128xf32>
    %174 = arith.subf %171, %173 : vector<1x128xf32>
    %175 = vector.extract_strided_slice %18 {offsets = [2, 0], sizes = [1, 128], strides = [1, 1]} : vector<6x128xf32> to vector<1x128xf32>
    %cst_37 = arith.constant 5.000000e-01 : f32
    %176 = vector.broadcast %cst_37 : f32 to vector<1x128xf32>
    %177 = arith.mulf %176, %162 : vector<1x128xf32>
    %178 = arith.addf %175, %177 : vector<1x128xf32>
    %179 = vector.broadcast %170 : vector<16x1xf32> to vector<16x128xf32>
    %180 = vector.broadcast %178 : vector<1x128xf32> to vector<16x128xf32>
    %181 = arith.minimumf %179, %180 : vector<16x128xf32>
    %182 = vector.broadcast %166 : vector<16x1xf32> to vector<16x128xf32>
    %183 = vector.broadcast %174 : vector<1x128xf32> to vector<16x128xf32>
    %184 = arith.maximumf %182, %183 : vector<16x128xf32>
    %185 = arith.subf %181, %184 : vector<16x128xf32>
    %cst_38 = arith.constant 0.000000e+00 : f32
    %186 = vector.broadcast %cst_38 : f32 to vector<16x128xf32>
    %187 = arith.maximumf %185, %186 : vector<16x128xf32>
    %188 = vector.broadcast %170 : vector<16x1xf32> to vector<16x128xf32>
    %189 = vector.broadcast %178 : vector<1x128xf32> to vector<16x128xf32>
    %190 = arith.maximumf %188, %189 : vector<16x128xf32>
    %191 = vector.broadcast %166 : vector<16x1xf32> to vector<16x128xf32>
    %192 = vector.broadcast %174 : vector<1x128xf32> to vector<16x128xf32>
    %193 = arith.minimumf %191, %192 : vector<16x128xf32>
    %194 = arith.subf %190, %193 : vector<16x128xf32>
    %cst_39 = arith.constant 0.000000e+00 : f32
    %195 = vector.broadcast %cst_39 : f32 to vector<16x128xf32>
    %196 = arith.maximumf %194, %195 : vector<16x128xf32>
    %197 = arith.mulf %153, %187 : vector<16x128xf32>
    %198 = arith.mulf %154, %196 : vector<16x128xf32>
    %199 = arith.mulf %155, %159 : vector<16x1xf32>
    %200 = arith.mulf %156, %162 : vector<1x128xf32>
    %201 = vector.broadcast %199 : vector<16x1xf32> to vector<16x128xf32>
    %202 = vector.broadcast %200 : vector<1x128xf32> to vector<16x128xf32>
    %203 = arith.addf %201, %202 : vector<16x128xf32>
    %204 = arith.subf %203, %197 : vector<16x128xf32>
    %cst_40 = arith.constant 9.99999996E-13 : f32
    %205 = vector.broadcast %cst_40 : f32 to vector<16x128xf32>
    %206 = arith.addf %204, %205 : vector<16x128xf32>
    %207 = tpu.reciprocal %206 {approx = true} : vector<16x128xf32> -> vector<16x128xf32>
    %cst_41 = arith.constant 9.99999996E-13 : f32
    %208 = vector.broadcast %cst_41 : f32 to vector<16x128xf32>
    %209 = arith.addf %198, %208 : vector<16x128xf32>
    %210 = tpu.reciprocal %209 {approx = true} : vector<16x128xf32> -> vector<16x128xf32>
    %211 = arith.mulf %197, %207 : vector<16x128xf32>
    %cst_42 = arith.constant 1.000000e+00 : f32
    %212 = vector.broadcast %cst_42 : f32 to vector<16x128xf32>
    %213 = arith.subf %211, %212 : vector<16x128xf32>
    %214 = arith.mulf %204, %210 : vector<16x128xf32>
    %215 = arith.addf %213, %214 : vector<16x128xf32>
    %cst_43 = arith.constant 0.000000e+00 : f32
    %216 = vector.broadcast %cst_43 : f32 to vector<16x128xf32>
    %217 = arith.subf %216, %215 : vector<16x128xf32>
    %cst_44 = arith.constant 2.000000e+00 : f32
    %218 = vector.broadcast %cst_44 : f32 to vector<16x128xf32>
    %219 = arith.mulf %218, %217 : vector<16x128xf32>
    %220 = arith.addf %72, %219 : vector<16x128xf32>
    %c0_45 = arith.constant 0 : index
    %c0_46 = arith.constant 0 : index
    %221 = vector.load %arg5[%c0_45, %c0_46] : memref<16x128xf32, #tpu.memory_space<vmem>>, vector<16x128xf32>
    tpu.vector_store %arg5[%c0_45, %c0_46], %220 {strides = array<i32>} : memref<16x128xf32, #tpu.memory_space<vmem>>, vector<16x128xf32>,
    return
  }
  func.func @transform_0(%arg0: i32) -> (i32, i32) {
    %c0_i32 = arith.constant 0 : i32
    %c0_i32_0 = arith.constant 0 : i32
    return %arg0, %c0_i32 : i32, i32
  }
  func.func @transform_1(%arg0: i32) -> (i32, i32) {
    %c0_i32 = arith.constant 0 : i32
    %c0_i32_0 = arith.constant 0 : i32
    %c0_i32_1 = arith.constant 0 : i32
    return %c0_i32, %c0_i32_0 : i32, i32
  }
  func.func @transform_2(%arg0: i32) -> (i32, i32) {
    %c0_i32 = arith.constant 0 : i32
    %c0_i32_0 = arith.constant 0 : i32
    return %arg0, %c0_i32 : i32, i32
  }
  func.func @transform_3(%arg0: i32) -> (i32, i32) {
    %c0_i32 = arith.constant 0 : i32
    %c0_i32_0 = arith.constant 0 : i32
    %c0_i32_1 = arith.constant 0 : i32
    return %c0_i32, %c0_i32_0 : i32, i32
  }
  func.func @transform_4(%arg0: i32) -> (i32, i32) {
    %c0_i32 = arith.constant 0 : i32
    %c0_i32_0 = arith.constant 0 : i32
    return %arg0, %c0_i32 : i32, i32
  }
}

</mosaic_0001>

<llo_original>
// kernel: tpu_custom_call.1
$region0: #{tpu_custom_call.1}
  #allocation0 [shape = 'u32[]', space=smem, size = 0x4, offset = 0x4, fixed_abs, tag = 'smem constant byte address 0x4 - core index']
  #allocation1 [shape = 'u32[72,128]{1,0:T(1,128)}', space=vmem, size = 0x9000, scoped, tag = 'internal scratch']
  %s0 = inlined_call_operand.vmem [shape: f32[16,32], index: 0, kind: input, shape index: {}]
  %s1 = inlined_call_operand.hbm [shape: f32[32,128], index: 1, kind: input, shape index: {}]
  %s2 = inlined_call_operand.vmem [shape: f32[16,6], index: 2, kind: input, shape index: {}]
  %s3 = inlined_call_operand.vmem [shape: f32[6,128], index: 3, kind: input, shape index: {}]
  %s4 = inlined_call_operand.hbm [shape: f32[16,128], index: 4, kind: output, shape index: {}]
  %s5 = sld [smem:[#allocation0]]
  $region30: #{tpu_custom_call.1} parent=0
    _
  %s7 = ssub.s32 1, %s5
  %s8 = scalar_select 0, %s7, %s5
  $region1: #{tpu_custom_call.1} parent=0
    #allocation2 [shape = 'u8[16384]{0}', space=vmem, size = 0x4000, scoped, tag = 'input window, operand 1, single buffered']
    #allocation3 [shape = 's32[1]{0}', space=sflag, size = 0x4, scoped, tag = 'scoped memory for tpu_custom_call.1']
    #allocation4 [shape = 's32[1]{0}', space=sflag, size = 0x4, scoped, tag = 'scoped memory for tpu_custom_call.1']
    #allocation5 [shape = 'u8[8192]{0}', space=vmem, size = 0x2000, scoped, tag = 'output window, operand 0, single buffered']
    %9 = vsyncpa [#allocation3], 0
    %10 = vsyncpa [#allocation4], 0
    // Predicated region
    $region2: #{tpu_custom_call.1} parent=1 // pred_check
      _
    $region3: #{tpu_custom_call.1} parent=1 // pred_check_branch
      %12 = sbr.rel (0) target = $region5
    $region4: #{tpu_custom_call.1} parent=1 // pred_region
      _
    $region5: #{tpu_custom_call.1} parent=1 // pred_fallthru
      _
    // Predicated region
    $region6: #{tpu_custom_call.1} parent=1 // pred_check
      _
    $region7: #{tpu_custom_call.1} parent=1 // pred_check_branch
      %14 = sbr.rel (0) target = $region9
    $region8: #{tpu_custom_call.1} parent=1 // pred_region
      %16 = vsyncadd [#allocation3], 0
      %s17 = sshll.u32 %s1, 4
      %s18 = int_to_ptr.hbm [resolvable:$true] %s17
      %s19 = sshll.u32 [#allocation2], 4
      %s20 = int_to_ptr.vmem [resolvable:$true] %s19
      %25 = dma.hbm_to_vmem [thread:$0]  %s18, 512, %s20, [#allocation3], 128, 128, 8
    $region9: #{tpu_custom_call.1} parent=1 // pred_fallthru
      _
    // Predicated region
    $region10: #{tpu_custom_call.1} parent=1 // pred_check
      _
    $region11: #{tpu_custom_call.1} parent=1 // pred_check_branch
      %27 = sbr.rel (0) target = $region13
    $region12: #{tpu_custom_call.1} parent=1 // pred_region
      _
    $region13: #{tpu_custom_call.1} parent=1 // pred_fallthru
      _
    // Predicated region
    $region14: #{tpu_custom_call.1} parent=1 // pred_check
      _
    $region15: #{tpu_custom_call.1} parent=1 // pred_check_branch
      %29 = sbr.rel (0) target = $region17
    $region16: #{tpu_custom_call.1} parent=1 // pred_region
      _
    $region17: #{tpu_custom_call.1} parent=1 // pred_fallthru
      _
    // Predicated region
    $region18: #{tpu_custom_call.1} parent=1 // pred_check
      _
    $region19: #{tpu_custom_call.1} parent=1 // pred_check_branch
      %31 = sbr.rel (0) target = $region21
    $region20: #{tpu_custom_call.1} parent=1 // pred_region
      %33 = dma.done [#allocation3], 512
    $region21: #{tpu_custom_call.1} parent=1 // pred_fallthru
      _
    %v35 = vld [vmem:[%s0] sm:$0xff]
    %v36 = vld [vmem:[%s0 + $0x8] sm:$0xff]
    %vm37 = vcmask 261120
    %v38 = vsel %vm37, %v35, -inf
    %39 = vmax.xlane.f32.xlu0 %v38
    %v40 = vpop.xlane.xlu0 %39
    %v41 = vsel %vm37, %v36, -inf
    %42 = vmax.xlane.f32.xlu0 %v41
    %v43 = vpop.xlane.xlu0 %42
    %v44 = vsub.f32 %v35, %v40
    %v45 = vsub.f32 %v36, %v43
    %v46 = vmul.f32 %v44, 1.442695
    %v47 = vpow.pop %v46
    %v48 = vmul.f32 %v45, 1.442695
    %v49 = vpow.pop %v48
    %v50 = vsel %vm37, %v47, 0.0
    %51 = vadd.xlane.f32.xlu0 %v50
    %v52 = vpop.xlane.xlu0 %51
    %v53 = vsel %vm37, %v49, 0.0
    %54 = vadd.xlane.f32.xlu0 %v53
    %v55 = vpop.xlane.xlu0 %54
    %v56 = vrcp.pop %v52
    %v57 = vrcp.pop %v55
    %v58 = vmul.f32 %v47, %v56
    %v59 = vmul.f32 %v49, %v57
    %v60 = vpack.c.bf16 %v59, %v58
    %v61 = vld [vmem:[#allocation2] sm:$0xff]
    %v62 = vld [vmem:[#allocation2 + $0x8] sm:$0xff]
    %v63 = vld [vmem:[#allocation2 + $0x10] sm:$0xff]
    %v64 = vld [vmem:[#allocation2 + $0x18] sm:$0xff]
    %v65 = vpack.c.bf16 %v62, %v61
    %v66 = vpack.c.bf16 %v64, %v63
    %v68 = vsel %vm37, %v60, 0
    %70 = vmatpush.bf16.msra.mxu0 0
    %71 = vmatpush.bf16.msra.mxu0 0
    %72 = vmatpush.bf16.msra.mxu0 0
    %73 = vmatpush.bf16.msra.mxu0 0
    %74 = vmatpush.bf16.msra.mxu0 0
    %75 = vmatpush.bf16.msra.mxu0 0
    %76 = vmatpush.bf16.msra.mxu0 %v66
    %77 = vmatpush.bf16.msra.mxu0 %v65
    %78 = vmatmul.bf16.gmra.mxu0 %v68
    %v79 = vpop.f32.mrf.mxu0
    %v80 = vadd.f32 0.0, %v79
    %v81 = vpop.f32.mrf.mxu0
    %v82 = vadd.f32 0.0, %v81
    %83 = vdwg.mxu0
    %v84 = vmul.f32 %v80, -1.0
    %v85 = vmul.f32 %v82, -1.0
    %v86 = vld [vmem:[%s2] sm:$0xff]
    %v87 = vld [vmem:[%s2 + $0x8] sm:$0xff]
    %v88 = vld [vmem:[%s3] sm:$0x3f]
    %90 = vset.pattern.permute.xlu0 0
    %91 = vperm.xlu0 %90, %v86
    %v92 = vpop.permute.xlu0 %91
    %95 = vset.pattern.permute.xlu0 0
    %96 = vperm.xlu0 %95, %v87
    %v97 = vpop.permute.xlu0 %96
    %v99 = vperm.slane %v88, 0
    %v100 = vsub.f32 %v92, %v99
    %v101 = vsub.f32 %v97, %v99
    %v102 = vand.u32 2147483647, %v100
    %v103 = vand.u32 2147483647, %v101
    %v104 = vmul.f32 %v102, 5.0
    %v105 = vmul.f32 %v103, 5.0
    %v106 = vadd.f32 %v84, %v104
    %v107 = vadd.f32 %v85, %v105
    %108 = vset.pattern.permute.xlu0 1
    %109 = vperm.xlu0 %108, %v86
    %v110 = vpop.permute.xlu0 %109
    %112 = vset.pattern.permute.xlu0 1
    %113 = vperm.xlu0 %112, %v87
    %v114 = vpop.permute.xlu0 %113
    %v116 = vperm.slane %v88, 1
    %v117 = vsub.f32 %v110, %v116
    %v118 = vsub.f32 %v114, %v116
    %v119 = vand.u32 2147483647, %v117
    %v120 = vand.u32 2147483647, %v118
    %v121 = vmul.f32 %v119, 5.0
    %v122 = vmul.f32 %v120, 5.0
    %v123 = vadd.f32 %v106, %v121
    %v124 = vadd.f32 %v107, %v122
    %125 = vset.pattern.permute.xlu0 2
    %126 = vperm.xlu0 %125, %v86
    %v127 = vpop.permute.xlu0 %126
    %129 = vset.pattern.permute.xlu0 2
    %130 = vperm.xlu0 %129, %v87
    %v131 = vpop.permute.xlu0 %130
    %v133 = vperm.slane %v88, 2
    %v134 = vsub.f32 %v127, %v133
    %v135 = vsub.f32 %v131, %v133
    %v136 = vand.u32 2147483647, %v134
    %v137 = vand.u32 2147483647, %v135
    %v138 = vmul.f32 %v136, 5.0
    %v139 = vmul.f32 %v137, 5.0
    %v140 = vadd.f32 %v123, %v138
    %v141 = vadd.f32 %v124, %v139
    %142 = vset.pattern.permute.xlu0 3
    %143 = vperm.xlu0 %142, %v86
    %v144 = vpop.permute.xlu0 %143
    %146 = vset.pattern.permute.xlu0 3
    %147 = vperm.xlu0 %146, %v87
    %v148 = vpop.permute.xlu0 %147
    %v150 = vperm.slane %v88, 3
    %v151 = vsub.f32 %v144, %v150
    %v152 = vsub.f32 %v148, %v150
    %v153 = vand.u32 2147483647, %v151
    %v154 = vand.u32 2147483647, %v152
    %v155 = vmul.f32 %v153, 5.0
    %v156 = vmul.f32 %v154, 5.0
    %v157 = vadd.f32 %v140, %v155
    %v158 = vadd.f32 %v141, %v156
    %159 = vset.pattern.permute.xlu0 4
    %160 = vperm.xlu0 %159, %v86
    %v161 = vpop.permute.xlu0 %160
    %163 = vset.pattern.permute.xlu0 4
    %164 = vperm.xlu0 %163, %v87
    %v165 = vpop.permute.xlu0 %164
    %v167 = vperm.slane %v88, 4
    %v168 = vsub.f32 %v161, %v167
    %v169 = vsub.f32 %v165, %v167
    %v170 = vand.u32 2147483647, %v168
    %v171 = vand.u32 2147483647, %v169
    %v172 = vmul.f32 %v170, 5.0
    %v173 = vmul.f32 %v171, 5.0
    %v174 = vadd.f32 %v157, %v172
    %v175 = vadd.f32 %v158, %v173
    %176 = vset.pattern.permute.xlu0 5
    %177 = vperm.xlu0 %176, %v86
    %v178 = vpop.permute.xlu0 %177
    %180 = vset.pattern.permute.xlu0 5
    %181 = vperm.xlu0 %180, %v87
    %v182 = vpop.permute.xlu0 %181
    %v184 = vperm.slane %v88, 5
    %v185 = vsub.f32 %v178, %v184
    %v186 = vsub.f32 %v182, %v184
    %v187 = vand.u32 2147483647, %v185
    %v188 = vand.u32 2147483647, %v186
    %v189 = vmul.f32 %v187, 5.0
    %v190 = vmul.f32 %v188, 5.0
    %v191 = vadd.f32 %v174, %v189
    %v192 = vadd.f32 %v175, %v190
    %v193 = vmax.f32 %v86, 1e-06
    %v194 = vmax.f32 %v87, 1e-06
    %v195 = vmax.f32 %v88, 1e-06
    %v196 = vmul.f32 %v193, 0.5
    %v197 = vmul.f32 %v194, 0.5
    %200 = vrot.lane.b32.xlu0 %v196, 125
    %v201 = vpop.permute.xlu0 %200
    %202 = vrot.lane.b32.xlu0 %v197, 125
    %v203 = vpop.permute.xlu0 %202
    %v206 = vsub.f32 %v86, %v201
    %v207 = vsub.f32 %v87, %v203
    %v208 = vadd.f32 %v86, %v201
    %v209 = vadd.f32 %v87, %v203
    %v210 = vmul.f32 %v195, 0.5
    %v212 = vrot.slane %v210, 3
    %v214 = vsub.f32 %v88, %v212
    %v215 = vadd.f32 %v88, %v212
    %217 = vset.pattern.permute.xlu0 0
    %218 = vperm.xlu0 %217, %v208
    %v219 = vpop.permute.xlu0 %218
    %222 = vset.pattern.permute.xlu0 0
    %223 = vperm.xlu0 %222, %v209
    %v224 = vpop.permute.xlu0 %223
    %v226 = vperm.slane %v215, 0
    %v227 = vmin.f32 %v219, %v226
    %v228 = vmin.f32 %v224, %v226
    %230 = vset.pattern.permute.xlu0 0
    %231 = vperm.xlu0 %230, %v206
    %v232 = vpop.permute.xlu0 %231
    %235 = vset.pattern.permute.xlu0 0
    %236 = vperm.xlu0 %235, %v207
    %v237 = vpop.permute.xlu0 %236
    %v239 = vperm.slane %v214, 0
    %v240 = vmax.f32 %v232, %v239
    %v241 = vmax.f32 %v237, %v239
    %v242 = vsub.f32 %v227, %v240
    %v243 = vsub.f32 %v228, %v241
    %v244 = vmax.f32 %v242, 0.0
    %v245 = vmax.f32 %v243, 0.0
    %v246 = vmax.f32 %v219, %v226
    %v247 = vmax.f32 %v224, %v226
    %v248 = vmin.f32 %v232, %v239
    %v249 = vmin.f32 %v237, %v239
    %v250 = vsub.f32 %v246, %v248
    %v251 = vsub.f32 %v247, %v249
    %v252 = vmax.f32 %v250, 0.0
    %v253 = vmax.f32 %v251, 0.0
    %254 = vset.pattern.permute.xlu0 1
    %255 = vperm.xlu0 %254, %v208
    %v256 = vpop.permute.xlu0 %255
    %258 = vset.pattern.permute.xlu0 1
    %259 = vperm.xlu0 %258, %v209
    %v260 = vpop.permute.xlu0 %259
    %v262 = vperm.slane %v215, 1
    %v263 = vmin.f32 %v256, %v262
    %v264 = vmin.f32 %v260, %v262
    %265 = vset.pattern.permute.xlu0 1
    %266 = vperm.xlu0 %265, %v206
    %v267 = vpop.permute.xlu0 %266
    %269 = vset.pattern.permute.xlu0 1
    %270 = vperm.xlu0 %269, %v207
    %v271 = vpop.permute.xlu0 %270
    %v273 = vperm.slane %v214, 1
    %v274 = vmax.f32 %v267, %v273
    %v275 = vmax.f32 %v271, %v273
    %v276 = vsub.f32 %v263, %v274
    %v277 = vsub.f32 %v264, %v275
    %v278 = vmax.f32 %v276, 0.0
    %v279 = vmax.f32 %v277, 0.0
    %v280 = vmax.f32 %v256, %v262
    %v281 = vmax.f32 %v260, %v262
    %v282 = vmin.f32 %v267, %v273
    %v283 = vmin.f32 %v271, %v273
    %v284 = vsub.f32 %v280, %v282
    %v285 = vsub.f32 %v281, %v283
    %v286 = vmax.f32 %v284, 0.0
    %v287 = vmax.f32 %v285, 0.0
    %v288 = vmul.f32 %v244, %v278
    %v289 = vmul.f32 %v245, %v279
    %v290 = vmul.f32 %v252, %v286
    %v291 = vmul.f32 %v253, %v287
    %294 = vrot.lane.b32.xlu0 %v193, 127
    %v295 = vpop.permute.xlu0 %294
    %296 = vrot.lane.b32.xlu0 %v194, 127
    %v297 = vpop.permute.xlu0 %296
    %v300 = vmul.f32 %v193, %v295
    %v301 = vmul.f32 %v194, %v297
    %v303 = vrot.slane %v195, 1
    %v305 = vmul.f32 %v195, %v303
    %306 = vset.pattern.permute.xlu0 2
    %307 = vperm.xlu0 %306, %v208
    %v308 = vpop.permute.xlu0 %307
    %310 = vset.pattern.permute.xlu0 2
    %311 = vperm.xlu0 %310, %v209
    %v312 = vpop.permute.xlu0 %311
    %v314 = vperm.slane %v215, 2
    %v315 = vmin.f32 %v308, %v314
    %v316 = vmin.f32 %v312, %v314
    %317 = vset.pattern.permute.xlu0 2
    %318 = vperm.xlu0 %317, %v206
    %v319 = vpop.permute.xlu0 %318
    %321 = vset.pattern.permute.xlu0 2
    %322 = vperm.xlu0 %321, %v207
    %v323 = vpop.permute.xlu0 %322
    %v325 = vperm.slane %v214, 2
    %v326 = vmax.f32 %v319, %v325
    %v327 = vmax.f32 %v323, %v325
    %v328 = vsub.f32 %v315, %v326
    %v329 = vsub.f32 %v316, %v327
    %v330 = vmax.f32 %v328, 0.0
    %v331 = vmax.f32 %v329, 0.0
    %v332 = vmax.f32 %v308, %v314
    %v333 = vmax.f32 %v312, %v314
    %v334 = vmin.f32 %v319, %v325
    %v335 = vmin.f32 %v323, %v325
    %v336 = vsub.f32 %v332, %v334
    %v337 = vsub.f32 %v333, %v335
    %v338 = vmax.f32 %v336, 0.0
    %v339 = vmax.f32 %v337, 0.0
    %v340 = vmul.f32 %v288, %v330
    %v341 = vmul.f32 %v289, %v331
    %v342 = vmul.f32 %v290, %v338
    %v343 = vmul.f32 %v291, %v339
    %344 = vrot.lane.b32.xlu0 %v193, 126
    %v345 = vpop.permute.xlu0 %344
    %346 = vrot.lane.b32.xlu0 %v194, 126
    %v347 = vpop.permute.xlu0 %346
    %v350 = vmul.f32 %v300, %v345
    %v351 = vmul.f32 %v301, %v347
    %v352 = vrot.slane %v195, 2
    %v354 = vmul.f32 %v305, %v352
    %356 = vset.pattern.permute.xlu0 3
    %357 = vperm.xlu0 %356, %v350
    %v358 = vpop.permute.xlu0 %357
    %361 = vset.pattern.permute.xlu0 3
    %362 = vperm.xlu0 %361, %v351
    %v363 = vpop.permute.xlu0 %362
    %v365 = vperm.slane %v354, 3
    %v366 = vadd.f32 %v358, %v365
    %v367 = vadd.f32 %v363, %v365
    %v368 = vsub.f32 %v366, %v340
    %v369 = vsub.f32 %v367, %v341
    %v370 = vadd.f32 %v368, 1e-12
    %v371 = vadd.f32 %v369, 1e-12
    %v372 = vrcp.pop %v370
    %v373 = vrcp.pop %v371
    %v374 = vadd.f32 %v342, 1e-12
    %v375 = vadd.f32 %v343, 1e-12
    %v376 = vrcp.pop %v374
    %v377 = vrcp.pop %v375
    %v378 = vmul.f32 %v340, %v372
    %v379 = vmul.f32 %v341, %v373
    %v380 = vsub.f32 %v378, 1.0
    %v381 = vsub.f32 %v379, 1.0
    %v382 = vmul.f32 %v368, %v376
    %v383 = vmul.f32 %v369, %v377
    %v384 = vadd.f32 %v380, %v382
    %v385 = vadd.f32 %v381, %v383
    %v386 = vsub.f32 0.0, %v384
    %v387 = vsub.f32 0.0, %v385
    %v388 = vmul.f32 %v386, 2.0
    %v389 = vmul.f32 %v387, 2.0
    %v390 = vadd.f32 %v191, %v388
    %v391 = vadd.f32 %v192, %v389
    %392 = vst [vmem:[#allocation5] sm:$0xff] %v390
    %393 = vst [vmem:[#allocation5 + $0x8] sm:$0xff] %v391
    // Predicated region
    $region22: #{tpu_custom_call.1} parent=1 // pred_check
      _
    $region23: #{tpu_custom_call.1} parent=1 // pred_check_branch
      %395 = sbr.rel (0) target = $region25
    $region24: #{tpu_custom_call.1} parent=1 // pred_region
      %397 = vsyncadd [#allocation4], 0
      %s398 = sshll.u32 [#allocation5], 4
      %s399 = int_to_ptr.vmem [resolvable:$true] %s398
      %s400 = sshll.u32 %s4, 4
      %s401 = int_to_ptr.hbm [resolvable:$true] %s400
      %406 = dma.vmem_to_hbm [thread:$0]  %s399, 256, %s401, [#allocation4], 128, 128, 8
    $region25: #{tpu_custom_call.1} parent=1 // pred_fallthru
      _
    // Predicated region
    $region26: #{tpu_custom_call.1} parent=1 // pred_check
      _
    $region27: #{tpu_custom_call.1} parent=1 // pred_check_branch
      %408 = sbr.rel (0) target = $region29
    $region28: #{tpu_custom_call.1} parent=1 // pred_region
      %410 = dma.done [#allocation4], 256
    $region29: #{tpu_custom_call.1} parent=1 // pred_fallthru
      _
    %411 = vsyncpa [#allocation3], 1
    %412 = vsyncpa [#allocation4], 1

</llo_original>
